<compile_context>
chip_gen: v7x
topology: tpu7x:2x2x1
jax: 0.10.0
libtpu: 0.0.40
codegen_flags: <defaults>
</compile_context>

<pallas_src>
import functools

import jax
import jax.numpy as jnp
from jax.experimental import pallas as pl
from jax.experimental.pallas import tpu as pltpu

HIDDEN = 128
OUT_W = 128   # lane-dense output slab width (value in lane 0, mean in 1..out_dim)
ALIGN = 16    # bf16 sublane-pack alignment


def _round_up(a, b):
    return ((a + b - 1) // b) * b


@functools.lru_cache(maxsize=1)
def _default_split_fc2():
    """Split layer-2 into two 128x128 matmuls only on v5e (4x128 MXU)."""
    try:
        kind = jax.devices()[0].device_kind.lower()
    except Exception:  # pragma: no cover - detection is best-effort only
        return False
    return ("v5 lite" in kind) or ("v5e" in kind) or ("v5litepod" in kind)


def _network_kernel(x_ref, w1_ref, b1_ref, w2_ref, b2_ref, w3_ref, b3_ref,
                    out_ref, *, split_fc2):
    x = x_ref[...]                                              # (B, in_dim) bf16

    # layer 1: [h | a] = relu(x @ [cw1 | aw1] + [cb1 | ab1])    (B, 256)
    y = jnp.dot(x, w1_ref[...], preferred_element_type=jnp.float32) + b1_ref[...]
    y = jnp.maximum(y, 0.0).astype(jnp.bfloat16)

    # layer 2: critic/actor paths kept separate.
    if split_fc2:
        # v5e: two 128-wide matmuls (full utilization of the 4x128 MXU).
        zc = jnp.dot(y[:, :HIDDEN], w2_ref[0],
                     preferred_element_type=jnp.float32)
        za = jnp.dot(y[:, HIDDEN:], w2_ref[1],
                     preferred_element_type=jnp.float32)
        z = jnp.concatenate([zc, za], axis=-1) + b2_ref[...]
    else:
        # v6e/v7x: single 256-wide block-diagonal matmul (native MXU width).
        z = jnp.dot(y, w2_ref[...], preferred_element_type=jnp.float32) + b2_ref[...]
    z = jnp.maximum(z, 0.0).astype(jnp.bfloat16)

    # layer 3: fused heads -> lane-dense slab (value lane 0, mean lanes 1..out_dim).
    slab = jnp.dot(z, w3_ref[...], preferred_element_type=jnp.float32) + b3_ref[...]
    out_ref[...] = slab.astype(out_ref.dtype)                   # bf16 writeback


def _pack_params(p, in_dim, out_dim, split_fc2):
    """Fuse critic+actor weights into lane-friendly bf16 matmuls (f32 biases)."""
    assert 1 + out_dim <= OUT_W, "out_dim too large for single 128-lane slab"
    w1f = jnp.concatenate([p["cw1"], p["aw1"]], axis=1).astype(jnp.bfloat16)
    b1f = jnp.concatenate([p["cb1"], p["ab1"]], axis=1).astype(jnp.float32)

    if split_fc2:
        w2f = jnp.stack([p["cw2"], p["aw2"]], axis=0).astype(jnp.bfloat16)  # (2,128,128)
    else:
        w2f = jnp.zeros((2 * HIDDEN, 2 * HIDDEN), jnp.float32)
        w2f = w2f.at[:HIDDEN, :HIDDEN].set(p["cw2"])
        w2f = w2f.at[HIDDEN:, HIDDEN:].set(p["aw2"])
        w2f = w2f.astype(jnp.bfloat16)                                      # (256,256)
    b2f = jnp.concatenate([p["cb2"], p["ab2"]], axis=1).astype(jnp.float32)

    w3f = jnp.zeros((2 * HIDDEN, OUT_W), jnp.float32)
    w3f = w3f.at[:HIDDEN, 0:1].set(p["cw3"])                    # value -> lane 0
    w3f = w3f.at[HIDDEN:, 1:1 + out_dim].set(p["aw3"])          # mean  -> lanes 1..out_dim
    w3f = w3f.astype(jnp.bfloat16)
    b3f = jnp.zeros((1, OUT_W), jnp.float32)
    b3f = b3f.at[:, 0:1].set(p["cb3"])
    b3f = b3f.at[:, 1:1 + out_dim].set(p["ab3"])
    return w1f, b1f, w2f, b2f, w3f, b3f


@functools.partial(jax.jit, static_argnames=("block_b", "split_fc2"))
def network_forward(x, params, *, block_b=2048, split_fc2=None):
    """Pallas forward of Network(input_dim, out_dim).

    x: (B, input_dim) float32
    returns: (value (B,1) f32, mean (B,out_dim) f32, sigma (B,out_dim) f32)
    """
    if split_fc2 is None:
        split_fc2 = _default_split_fc2()

    B, in_dim = x.shape
    out_dim = params["aw3"].shape[1]

    w1f, b1f, w2f, b2f, w3f, b3f = _pack_params(params, in_dim, out_dim, split_fc2)

    # bf16 inputs: halves x DMA bytes, MXU-native on all generations.
    x = x.astype(jnp.bfloat16)

    # Pad batch only to the sublane alignment; Pallas handles a partial last
    # block (OOB reads confined to per-row garbage, OOB writes discarded).
    B_pad = _round_up(B, ALIGN)
    if B_pad != B:
        x = jnp.pad(x, ((0, B_pad - B), (0, 0)))

    # Batch tile: as large as requested, but allow a 2-way split so v7x's two
    # TensorCores both get work when B would otherwise fit in one tile.
    block_b = _round_up(max(block_b, ALIGN), ALIGN)
    half = _round_up(pl.cdiv(B_pad, 2), ALIGN)
    block_b_eff = max(ALIGN, min(block_b, half))

    num_steps = pl.cdiv(B_pad, block_b_eff)
    grid = (num_steps,)

    def full_spec(shape):
        return pl.BlockSpec(shape, lambda i, _n=len(shape): (0,) * _n)

    in_specs = [
        pl.BlockSpec((block_b_eff, in_dim), lambda i: (i, 0)),   # x tile
        full_spec(w1f.shape), full_spec(b1f.shape),
        full_spec(w2f.shape), full_spec(b2f.shape),
        full_spec(w3f.shape), full_spec(b3f.shape),
    ]
    out_specs = pl.BlockSpec((block_b_eff, OUT_W), lambda i: (i, 0))
    out_shape = jax.ShapeDtypeStruct((B_pad, OUT_W), jnp.bfloat16)

    cp_kwargs = dict(dimension_semantics=("parallel",))
    if block_b_eff >= 4096:
        # v5e default scoped VMEM is only 16 MiB; give headroom for big tiles.
        cp_kwargs["vmem_limit_bytes"] = 32 * 1024 * 1024

    slab = pl.pallas_call(
        functools.partial(_network_kernel, split_fc2=split_fc2),
        grid=grid,
        in_specs=in_specs,
        out_specs=out_specs,
        out_shape=out_shape,
        compiler_params=pltpu.CompilerParams(**cp_kwargs),
    )(x, w1f, b1f, w2f, b2f, w3f, b3f)

    value = slab[:B, 0:1].astype(jnp.float32)
    mean = slab[:B, 1:1 + out_dim].astype(jnp.float32)
    # sigma is x-independent: compute once in the wrapper, broadcast to mean's shape.
    sigma = jnp.broadcast_to(jnp.exp(params["sigma_log"]), (B, out_dim))
    return value, mean, sigma


def init_params(key, input_dim, out_dim):
    """Deterministic init mimicking nn.Linear default (uniform +-1/sqrt(fan_in)).
    Weights stored as (in_features, out_features); biases as (1, out_features)."""
    def linear(k, fan_in, fan_out):
        kw, kb = jax.random.split(k)
        bound = 1.0 / jnp.sqrt(fan_in)
        w = jax.random.uniform(kw, (fan_in, fan_out), jnp.float32, -bound, bound)
        b = jax.random.uniform(kb, (1, fan_out), jnp.float32, -bound, bound)
        return w, b

    keys = jax.random.split(key, 6)
    cw1, cb1 = linear(keys[0], input_dim, HIDDEN)
    cw2, cb2 = linear(keys[1], HIDDEN, HIDDEN)
    cw3, cb3 = linear(keys[2], HIDDEN, 1)
    aw1, ab1 = linear(keys[3], input_dim, HIDDEN)
    aw2, ab2 = linear(keys[4], HIDDEN, HIDDEN)
    aw3, ab3 = linear(keys[5], HIDDEN, out_dim)
    sigma_log = jnp.zeros((1, out_dim), jnp.float32)  # nn.Parameter(torch.zeros(1,out_dim))
    return dict(cw1=cw1, cb1=cb1, cw2=cw2, cb2=cb2, cw3=cw3, cb3=cb3,
                aw1=aw1, ab1=ab1, aw2=aw2, ab2=ab2, aw3=aw3, ab3=ab3,
                sigma_log=sigma_log)


def network_forward_ref(x, p):
    """Pure-JAX f32 reference for correctness checking."""
    h = jax.nn.relu(x @ p["cw1"] + p["cb1"])
    h = jax.nn.relu(h @ p["cw2"] + p["cb2"])
    value = h @ p["cw3"] + p["cb3"]
    a = jax.nn.relu(x @ p["aw1"] + p["ab1"])
    a = jax.nn.relu(a @ p["aw2"] + p["ab2"])
    mean = a @ p["aw3"] + p["ab3"]
    sigma = jnp.exp(jnp.broadcast_to(p["sigma_log"], mean.shape))
    return value, mean, sigma


if __name__ == "__main__":
    key = jax.random.PRNGKey(0)
    k_param, k_x = jax.random.split(key)

    B, input_dim, out_dim = 8, 32, 4
    params = init_params(k_param, input_dim, out_dim)
    x = jax.random.normal(k_x, (B, input_dim), jnp.float32)

    # bf16 matmul inputs + bf16 slab writeback -> loosened tolerances vs f32 ref.
    TOL = dict(atol=5e-2, rtol=5e-2)

    value, mean, sigma = network_forward(x, params)
    jax.block_until_ready((value, mean, sigma))

    v_ref, m_ref, s_ref = network_forward_ref(x, params)
    assert value.shape == (B, 1) and mean.shape == (B, out_dim) and sigma.shape == (B, out_dim)
    assert jnp.allclose(value, v_ref, **TOL)
    assert jnp.allclose(mean, m_ref, **TOL)
    assert jnp.allclose(sigma, s_ref, atol=1e-6, rtol=1e-6)

    # Exercise a non-aligned batch with a multi-step grid and a partial last block.
    B2 = 300
    x2 = jax.random.normal(jax.random.PRNGKey(1), (B2, input_dim), jnp.float32)
    v2, m2, s2 = network_forward(x2, params, block_b=128)
    jax.block_until_ready((v2, m2, s2))
    v2r, m2r, s2r = network_forward_ref(x2, params)
    assert v2.shape == (B2, 1) and m2.shape == (B2, out_dim)
    assert jnp.allclose(v2, v2r, **TOL)
    assert jnp.allclose(m2, m2r, **TOL)
    assert jnp.allclose(s2, s2r, atol=1e-6, rtol=1e-6)

    # Also exercise the v5e-style split-fc2 code path explicitly.
    v3, m3, s3 = network_forward(x2, params, block_b=2048, split_fc2=True)
    jax.block_until_ready((v3, m3, s3))
    assert jnp.allclose(v3, v2r, **TOL)
    assert jnp.allclose(m3, m2r, **TOL)

    print("KERNEL_OK")
</pallas_src>

<mosaic_0001>
module attributes {stable_mosaic.version = 11 : i64} {
  func.func @_network_kernel(%arg0: i32, %arg1: memref<16x32xbf16, #tpu.memory_space<vmem>>, %arg2: memref<32x256xbf16, #tpu.memory_space<vmem>>, %arg3: memref<1x256xf32, #tpu.memory_space<vmem>>, %arg4: memref<256x256xbf16, #tpu.memory_space<vmem>>, %arg5: memref<1x256xf32, #tpu.memory_space<vmem>>, %arg6: memref<256x128xbf16, #tpu.memory_space<vmem>>, %arg7: memref<1x128xf32, #tpu.memory_space<vmem>>, %arg8: memref<16x128xbf16, #tpu.memory_space<vmem>>) attributes {dimension_semantics = [#tpu.dimension_semantics<parallel>], iteration_bounds = array<i64: 1>, scalar_prefetch = 0 : i64, scratch_operands = 0 : i64, tpu.core_type = #tpu.core_type<tc>, window_params = [{transform_indices = @transform_0, window_bounds = array<i64: 16, 32>}, {pipeline_mode = #tpu.pipeline_mode<synchronous>, transform_indices = @transform_1, window_bounds = array<i64: 32, 256>}, {pipeline_mode = #tpu.pipeline_mode<synchronous>, transform_indices = @transform_2, window_bounds = array<i64: 1, 256>}, {pipeline_mode = #tpu.pipeline_mode<synchronous>, transform_indices = @transform_3, window_bounds = array<i64: 256, 256>}, {pipeline_mode = #tpu.pipeline_mode<synchronous>, transform_indices = @transform_4, window_bounds = array<i64: 1, 256>}, {pipeline_mode = #tpu.pipeline_mode<synchronous>, transform_indices = @transform_5, window_bounds = array<i64: 256, 128>}, {pipeline_mode = #tpu.pipeline_mode<synchronous>, transform_indices = @transform_6, window_bounds = array<i64: 1, 128>}, {transform_indices = @transform_7, window_bounds = array<i64: 16, 128>}]} {
    %c0 = arith.constant 0 : index
    %c0_0 = arith.constant 0 : index
    %0 = vector.load %arg1[%c0, %c0_0] : memref<16x32xbf16, #tpu.memory_space<vmem>>, vector<16x32xbf16>
    %c0_1 = arith.constant 0 : index
    %c0_2 = arith.constant 0 : index
    %1 = vector.load %arg2[%c0_1, %c0_2] : memref<32x256xbf16, #tpu.memory_space<vmem>>, vector<32x256xbf16>
    %cst = arith.constant dense<0.000000e+00> : vector<16x256xf32>
    %2 = tpu.matmul %0, %1, %cst {dimension_numbers = #tpu.dot_dimension_numbers<[1], [0], [0], [1], [0, 0, 1, 1], [], []>} : vector<16x32xbf16>, vector<32x256xbf16>, vector<16x256xf32> -> vector<16x256xf32>
    %c0_3 = arith.constant 0 : index
    %c0_4 = arith.constant 0 : index
    %3 = vector.load %arg3[%c0_3, %c0_4] : memref<1x256xf32, #tpu.memory_space<vmem>>, vector<1x256xf32>
    %4 = vector.broadcast %3 : vector<1x256xf32> to vector<16x256xf32>
    %5 = arith.addf %2, %4 : vector<16x256xf32>
    %cst_5 = arith.constant 0.000000e+00 : f32
    %6 = vector.broadcast %cst_5 : f32 to vector<16x256xf32>
    %7 = arith.maximumf %5, %6 : vector<16x256xf32>
    %8 = arith.truncf %7 : vector<16x256xf32> to vector<16x256xbf16>
    %c0_6 = arith.constant 0 : index
    %c0_7 = arith.constant 0 : index
    %9 = vector.load %arg4[%c0_6, %c0_7] : memref<256x256xbf16, #tpu.memory_space<vmem>>, vector<256x256xbf16>
    %cst_8 = arith.constant dense<0.000000e+00> : vector<16x256xf32>
    %10 = tpu.matmul %8, %9, %cst_8 {dimension_numbers = #tpu.dot_dimension_numbers<[1], [0], [0], [1], [0, 0, 1, 1], [], []>} : vector<16x256xbf16>, vector<256x256xbf16>, vector<16x256xf32> -> vector<16x256xf32>
    %c0_9 = arith.constant 0 : index
    %c0_10 = arith.constant 0 : index
    %11 = vector.load %arg5[%c0_9, %c0_10] : memref<1x256xf32, #tpu.memory_space<vmem>>, vector<1x256xf32>
    %12 = vector.broadcast %11 : vector<1x256xf32> to vector<16x256xf32>
    %13 = arith.addf %10, %12 : vector<16x256xf32>
    %cst_11 = arith.constant 0.000000e+00 : f32
    %14 = vector.broadcast %cst_11 : f32 to vector<16x256xf32>
    %15 = arith.maximumf %13, %14 : vector<16x256xf32>
    %16 = arith.truncf %15 : vector<16x256xf32> to vector<16x256xbf16>
    %c0_12 = arith.constant 0 : index
    %c0_13 = arith.constant 0 : index
    %17 = vector.load %arg6[%c0_12, %c0_13] : memref<256x128xbf16, #tpu.memory_space<vmem>>, vector<256x128xbf16>
    %cst_14 = arith.constant dense<0.000000e+00> : vector<16x128xf32>
    %18 = tpu.matmul %16, %17, %cst_14 {dimension_numbers = #tpu.dot_dimension_numbers<[1], [0], [0], [1], [0, 0, 1, 1], [], []>} : vector<16x256xbf16>, vector<256x128xbf16>, vector<16x128xf32> -> vector<16x128xf32>
    %c0_15 = arith.constant 0 : index
    %c0_16 = arith.constant 0 : index
    %19 = vector.load %arg7[%c0_15, %c0_16] : memref<1x128xf32, #tpu.memory_space<vmem>>, vector<1x128xf32>
    %20 = vector.broadcast %19 : vector<1x128xf32> to vector<16x128xf32>
    %21 = arith.addf %18, %20 : vector<16x128xf32>
    %22 = arith.truncf %21 : vector<16x128xf32> to vector<16x128xbf16>
    %c0_17 = arith.constant 0 : index
    %c0_18 = arith.constant 0 : index
    %23 = vector.load %arg8[%c0_17, %c0_18] : memref<16x128xbf16, #tpu.memory_space<vmem>>, vector<16x128xbf16>
    tpu.vector_store %arg8[%c0_17, %c0_18], %22 {strides = array<i32>} : memref<16x128xbf16, #tpu.memory_space<vmem>>, vector<16x128xbf16>,
    return
  }
  func.func @transform_0(%arg0: i32) -> (i32, i32) {
    %c0_i32 = arith.constant 0 : i32
    %c0_i32_0 = arith.constant 0 : i32
    return %arg0, %c0_i32 : i32, i32
  }
  func.func @transform_1(%arg0: i32) -> (i32, i32) {
    %c0_i32 = arith.constant 0 : i32
    %c0_i32_0 = arith.constant 0 : i32
    %c0_i32_1 = arith.constant 0 : i32
    return %c0_i32, %c0_i32_0 : i32, i32
  }
  func.func @transform_2(%arg0: i32) -> (i32, i32) {
    %c0_i32 = arith.constant 0 : i32
    %c0_i32_0 = arith.constant 0 : i32
    %c0_i32_1 = arith.constant 0 : i32
    return %c0_i32, %c0_i32_0 : i32, i32
  }
  func.func @transform_3(%arg0: i32) -> (i32, i32) {
    %c0_i32 = arith.constant 0 : i32
    %c0_i32_0 = arith.constant 0 : i32
    %c0_i32_1 = arith.constant 0 : i32
    return %c0_i32, %c0_i32_0 : i32, i32
  }
  func.func @transform_4(%arg0: i32) -> (i32, i32) {
    %c0_i32 = arith.constant 0 : i32
    %c0_i32_0 = arith.constant 0 : i32
    %c0_i32_1 = arith.constant 0 : i32
    return %c0_i32, %c0_i32_0 : i32, i32
  }
  func.func @transform_5(%arg0: i32) -> (i32, i32) {
    %c0_i32 = arith.constant 0 : i32
    %c0_i32_0 = arith.constant 0 : i32
    %c0_i32_1 = arith.constant 0 : i32
    return %c0_i32, %c0_i32_0 : i32, i32
  }
  func.func @transform_6(%arg0: i32) -> (i32, i32) {
    %c0_i32 = arith.constant 0 : i32
    %c0_i32_0 = arith.constant 0 : i32
    %c0_i32_1 = arith.constant 0 : i32
    return %c0_i32, %c0_i32_0 : i32, i32
  }
  func.func @transform_7(%arg0: i32) -> (i32, i32) {
    %c0_i32 = arith.constant 0 : i32
    %c0_i32_0 = arith.constant 0 : i32
    return %arg0, %c0_i32 : i32, i32
  }
}

</mosaic_0001>

<llo_original>
// kernel: network_forward.1
$region0: #{network_forward.1}
  #allocation0 [shape = 'u32[]', space=smem, size = 0x4, offset = 0x4, fixed_abs, tag = 'smem constant byte address 0x4 - core index']
  #allocation1 [shape = 'u32[144,128]{1,0:T(1,128)}', space=vmem, size = 0x12000, scoped, tag = 'internal scratch']
  %s0 = inlined_call_operand.vmem [shape: bf16[16,32], index: 0, kind: input, shape index: {}]
  %s1 = inlined_call_operand.vmem [shape: bf16[32,256], index: 1, kind: input, shape index: {}]
  %s2 = inlined_call_operand.vmem [shape: f32[1,256], index: 2, kind: input, shape index: {}]
  %s3 = inlined_call_operand.vmem [shape: bf16[256,256], index: 3, kind: input, shape index: {}]
  %s4 = inlined_call_operand.vmem [shape: f32[1,256], index: 4, kind: input, shape index: {}]
  %s5 = inlined_call_operand.vmem [shape: bf16[256,128], index: 5, kind: input, shape index: {}]
  %s6 = inlined_call_operand.vmem [shape: f32[1,128], index: 6, kind: input, shape index: {}]
  %s7 = inlined_call_operand.vmem [shape: bf16[16,128], index: 7, kind: output, shape index: {}]
  %s8 = sld [smem:[#allocation0]]
  $region38: #{network_forward.1} parent=0
    _
  %s10 = ssub.s32 1, %s8
  %s11 = scalar_select 0, %s10, %s8
  // Predicated region
  $region2: #{network_forward.1} parent=0 // pred_check
    _
  $region3: #{network_forward.1} parent=0 // pred_check_branch
    %13 = sbr.rel (0) target = $region5
  $region4: #{network_forward.1} parent=0 // pred_region
    _
  $region5: #{network_forward.1} parent=0 // pred_fallthru
    _
  // Predicated region
  $region6: #{network_forward.1} parent=0 // pred_check
    _
  $region7: #{network_forward.1} parent=0 // pred_check_branch
    %15 = sbr.rel (0) target = $region9
  $region8: #{network_forward.1} parent=0 // pred_region
    _
  $region9: #{network_forward.1} parent=0 // pred_fallthru
    _
  // Predicated region
  $region10: #{network_forward.1} parent=0 // pred_check
    _
  $region11: #{network_forward.1} parent=0 // pred_check_branch
    %17 = sbr.rel (0) target = $region13
  $region12: #{network_forward.1} parent=0 // pred_region
    _
  $region13: #{network_forward.1} parent=0 // pred_fallthru
    _
  // Predicated region
  $region14: #{network_forward.1} parent=0 // pred_check
    _
  $region15: #{network_forward.1} parent=0 // pred_check_branch
    %19 = sbr.rel (0) target = $region17
  $region16: #{network_forward.1} parent=0 // pred_region
    _
  $region17: #{network_forward.1} parent=0 // pred_fallthru
    _
  // Predicated region
  $region18: #{network_forward.1} parent=0 // pred_check
    _
  $region19: #{network_forward.1} parent=0 // pred_check_branch
    %21 = sbr.rel (0) target = $region21
  $region20: #{network_forward.1} parent=0 // pred_region
    _
  $region21: #{network_forward.1} parent=0 // pred_fallthru
    _
  // Predicated region
  $region22: #{network_forward.1} parent=0 // pred_check
    _
  $region23: #{network_forward.1} parent=0 // pred_check_branch
    %23 = sbr.rel (0) target = $region25
  $region24: #{network_forward.1} parent=0 // pred_region
    _
  $region25: #{network_forward.1} parent=0 // pred_fallthru
    _
  // Predicated region
  $region26: #{network_forward.1} parent=0 // pred_check
    _
  $region27: #{network_forward.1} parent=0 // pred_check_branch
    %25 = sbr.rel (0) target = $region29
  $region28: #{network_forward.1} parent=0 // pred_region
    _
  $region29: #{network_forward.1} parent=0 // pred_fallthru
    _
  %v27 = vld [vmem:[%s0] sm:$0xf]
  %v28 = vld [vmem:[%s0 + $0x4] sm:$0xf]
  %v29 = vld [vmem:[%s1] sm:$0xff]
  %v30 = vld [vmem:[%s1 + $0x8] sm:$0xff]
  %v31 = vld [vmem:[%s1 + $0x10] sm:$0xff]
  %v32 = vld [vmem:[%s1 + $0x18] sm:$0xff]
  %v33 = vld [vmem:[%s2] sm:$0x3]
  %v35 = vlaneseq
  %v36 = vshrl.u32 %v35, 7
  %v37 = vsub.s32 0, %v36
  %v38 = vrot.slane %v33, %v37
  %v39 = vlaneseq
  %v40 = vshrl.u32 %v39, 7
  %v41 = vsub.s32 1, %v40
  %v42 = vrot.slane %v33, %v41
  %v47 = vunpack.c.l.b16 %v27
  %v48 = vunpack.c.l.b16 %v28
  %v49 = vpack.c.b16 %v48, %v47
  %v54 = vunpack.c.l.b16 %v29
  %v55 = vunpack.c.h.b16 %v29
  %v56 = vunpack.c.l.b16 %v30
  %v57 = vunpack.c.h.b16 %v30
  %v58 = vunpack.c.l.b16 %v31
  %v59 = vunpack.c.h.b16 %v31
  %v60 = vunpack.c.l.b16 %v32
  %v61 = vunpack.c.h.b16 %v32
  %v62 = vpack.c.b16 %v56, %v54
  %v63 = vpack.c.b16 %v57, %v55
  %v64 = vpack.c.b16 %v60, %v58
  %v65 = vpack.c.b16 %v61, %v59
  %vm70 = vcmask 261120
  %v72 = vsel %vm70, %v49, 0
  %74 = vmatprep.subr.bf16.mxu0 %v63
  %75 = vmatpush1.bf16.msra.mxu0 %v62
  %76 = vmatprep.subr.bf16.mxu0 %v65
  %77 = vmatpush1.bf16.msra.mxu0 %v64
  %78 = vmatprep.subr.bf16.mxu0 0
  %79 = vmatpush1.bf16.msra.mxu0 0
  %80 = vmatprep.subr.bf16.mxu0 0
  %81 = vmatpush1.bf16.msra.mxu0 0
  %82 = vmatprep.subr.bf16.mxu0 0
  %83 = vmatpush1.bf16.msra.mxu0 0
  %84 = vmatprep.subr.bf16.mxu0 0
  %85 = vmatpush1.bf16.msra.mxu0 0
  %86 = vmatprep.subr.bf16.mxu0 0
  %87 = vmatpush1.bf16.msra.mxu0 0
  %88 = vmatprep.subr.bf16.mxu0 0
  %89 = vmatpush1.bf16.msra.mxu0 0
  %90 = vmatprep.subr.bf16.mxu0 0
  %91 = vmatpush1.bf16.msra.mxu0 0
  %92 = vmatprep.subr.bf16.mxu0 0
  %93 = vmatpush1.bf16.msra.mxu0 0
  %94 = vmatprep.subr.bf16.mxu0 0
  %95 = vmatpush1.bf16.msra.mxu0 0
  %96 = vmatprep.subr.bf16.mxu0 0
  %97 = vmatpush1.bf16.msra.mxu0 0
  %98 = vmatprep.subr.bf16.mxu0 0
  %99 = vmatpush1.bf16.msra.mxu0 0
  %100 = vmatprep.subr.bf16.mxu0 0
  %101 = vmatpush1.bf16.msra.mxu0 0
  %102 = vmatprep.subr.bf16.mxu0 0
  %103 = vmatpush1.bf16.msra.mxu0 0
  %104 = vmatprep.subr.bf16.mxu0 0
  %105 = vmatpush1.bf16.msra.mxu0 0
  %106 = vmatprep.mubr.bf16.mxu0 0
  %107 = vmatmul.mubr.bf16.gmra.mrb[0].mxu0 %v72
  %v108 = vpop.f32.mrb[0].mxu0
  %v109 = vadd.f32 %v38, %v108
  %v110 = vpop.f32.mrb[0].mxu0
  %v111 = vadd.f32 %v42, %v110
  %v112 = vpop.f32.mrb[0].mxu0
  %v113 = vadd.f32 %v38, %v112
  %v114 = vpop.f32.mrb[0].mxu0
  %v115 = vadd.f32 %v42, %v114
  %116 = vdwg.mxu0
  %v117 = vmax.f32 %v109, 0.0
  %v118 = vmax.f32 %v111, 0.0
  %v119 = vmax.f32 %v113, 0.0
  %v120 = vmax.f32 %v115, 0.0
  %v121 = vpack.c.bf16 %v119, %v117
  %v122 = vpack.c.bf16 %v120, %v118
  %v123 = vld [vmem:[%s3] sm:$0xff]
  %v124 = vld [vmem:[%s3 + $0x8] sm:$0xff]
  %v125 = vld [vmem:[%s3 + $0x10] sm:$0xff]
  %v126 = vld [vmem:[%s3 + $0x18] sm:$0xff]
  %v127 = vld [vmem:[%s3 + $0x20] sm:$0xff]
  %v128 = vld [vmem:[%s3 + $0x28] sm:$0xff]
  %v129 = vld [vmem:[%s3 + $0x30] sm:$0xff]
  %v130 = vld [vmem:[%s3 + $0x38] sm:$0xff]
  %v131 = vld [vmem:[%s3 + $0x40] sm:$0xff]
  %v132 = vld [vmem:[%s3 + $0x48] sm:$0xff]
  %v133 = vld [vmem:[%s3 + $0x50] sm:$0xff]
  %v134 = vld [vmem:[%s3 + $0x58] sm:$0xff]
  %v135 = vld [vmem:[%s3 + $0x60] sm:$0xff]
  %v136 = vld [vmem:[%s3 + $0x68] sm:$0xff]
  %v137 = vld [vmem:[%s3 + $0x70] sm:$0xff]
  %v138 = vld [vmem:[%s3 + $0x78] sm:$0xff]
  %v139 = vld [vmem:[%s3 + $0x80] sm:$0xff]
  %v140 = vld [vmem:[%s3 + $0x88] sm:$0xff]
  %v141 = vld [vmem:[%s3 + $0x90] sm:$0xff]
  %v142 = vld [vmem:[%s3 + $0x98] sm:$0xff]
  %v143 = vld [vmem:[%s3 + $0xa0] sm:$0xff]
  %v144 = vld [vmem:[%s3 + $0xa8] sm:$0xff]
  %v145 = vld [vmem:[%s3 + $0xb0] sm:$0xff]
  %v146 = vld [vmem:[%s3 + $0xb8] sm:$0xff]
  %v147 = vld [vmem:[%s3 + $0xc0] sm:$0xff]
  %v148 = vld [vmem:[%s3 + $0xc8] sm:$0xff]
  %v149 = vld [vmem:[%s3 + $0xd0] sm:$0xff]
  %v150 = vld [vmem:[%s3 + $0xd8] sm:$0xff]
  %v151 = vld [vmem:[%s3 + $0xe0] sm:$0xff]
  %v152 = vld [vmem:[%s3 + $0xe8] sm:$0xff]
  %v153 = vld [vmem:[%s3 + $0xf0] sm:$0xff]
  %v154 = vld [vmem:[%s3 + $0xf8] sm:$0xff]
  %v155 = vld [vmem:[%s4] sm:$0x3]
  %v157 = vlaneseq
  %v158 = vshrl.u32 %v157, 7
  %v159 = vsub.s32 0, %v158
  %v160 = vrot.slane %v155, %v159
  %v161 = vlaneseq
  %v162 = vshrl.u32 %v161, 7
  %v163 = vsub.s32 1, %v162
  %v164 = vrot.slane %v155, %v163
  %v199 = vunpack.c.l.b16 %v123
  %v200 = vunpack.c.h.b16 %v123
  %v201 = vunpack.c.l.b16 %v124
  %v202 = vunpack.c.h.b16 %v124
  %v203 = vunpack.c.l.b16 %v125
  %v204 = vunpack.c.h.b16 %v125
  %v205 = vunpack.c.l.b16 %v126
  %v206 = vunpack.c.h.b16 %v126
  %v207 = vunpack.c.l.b16 %v127
  %v208 = vunpack.c.h.b16 %v127
  %v209 = vunpack.c.l.b16 %v128
  %v210 = vunpack.c.h.b16 %v128
  %v211 = vunpack.c.l.b16 %v129
  %v212 = vunpack.c.h.b16 %v129
  %v213 = vunpack.c.l.b16 %v130
  %v214 = vunpack.c.h.b16 %v130
  %v215 = vunpack.c.l.b16 %v131
  %v216 = vunpack.c.h.b16 %v131
  %v217 = vunpack.c.l.b16 %v132
  %v218 = vunpack.c.h.b16 %v132
  %v219 = vunpack.c.l.b16 %v133
  %v220 = vunpack.c.h.b16 %v133
  %v221 = vunpack.c.l.b16 %v134
  %v222 = vunpack.c.h.b16 %v134
  %v223 = vunpack.c.l.b16 %v135
  %v224 = vunpack.c.h.b16 %v135
  %v225 = vunpack.c.l.b16 %v136
  %v226 = vunpack.c.h.b16 %v136
  %v227 = vunpack.c.l.b16 %v137
  %v228 = vunpack.c.h.b16 %v137
  %v229 = vunpack.c.l.b16 %v138
  %v230 = vunpack.c.h.b16 %v138
  %v231 = vunpack.c.l.b16 %v139
  %v232 = vunpack.c.h.b16 %v139
  %v233 = vunpack.c.l.b16 %v140
  %v234 = vunpack.c.h.b16 %v140
  %v235 = vunpack.c.l.b16 %v141
  %v236 = vunpack.c.h.b16 %v141
  %v237 = vunpack.c.l.b16 %v142
  %v238 = vunpack.c.h.b16 %v142
  %v239 = vunpack.c.l.b16 %v143
  %v240 = vunpack.c.h.b16 %v143
  %v241 = vunpack.c.l.b16 %v144
  %v242 = vunpack.c.h.b16 %v144
  %v243 = vunpack.c.l.b16 %v145
  %v244 = vunpack.c.h.b16 %v145
  %v245 = vunpack.c.l.b16 %v146
  %v246 = vunpack.c.h.b16 %v146
  %v247 = vunpack.c.l.b16 %v147
  %v248 = vunpack.c.h.b16 %v147
  %v249 = vunpack.c.l.b16 %v148
  %v250 = vunpack.c.h.b16 %v148
  %v251 = vunpack.c.l.b16 %v149
  %v252 = vunpack.c.h.b16 %v149
  %v253 = vunpack.c.l.b16 %v150
  %v254 = vunpack.c.h.b16 %v150
  %v255 = vunpack.c.l.b16 %v151
  %v256 = vunpack.c.h.b16 %v151
  %v257 = vunpack.c.l.b16 %v152
  %v258 = vunpack.c.h.b16 %v152
  %v259 = vunpack.c.l.b16 %v153
  %v260 = vunpack.c.h.b16 %v153
  %v261 = vunpack.c.l.b16 %v154
  %v262 = vunpack.c.h.b16 %v154
  %v263 = vpack.c.b16 %v201, %v199
  %v264 = vpack.c.b16 %v202, %v200
  %v265 = vpack.c.b16 %v205, %v203
  %v266 = vpack.c.b16 %v206, %v204
  %v267 = vpack.c.b16 %v209, %v207
  %v268 = vpack.c.b16 %v210, %v208
  %v269 = vpack.c.b16 %v213, %v211
  %v270 = vpack.c.b16 %v214, %v212
  %v271 = vpack.c.b16 %v217, %v215
  %v272 = vpack.c.b16 %v218, %v216
  %v273 = vpack.c.b16 %v221, %v219
  %v274 = vpack.c.b16 %v222, %v220
  %v275 = vpack.c.b16 %v225, %v223
  %v276 = vpack.c.b16 %v226, %v224
  %v277 = vpack.c.b16 %v229, %v227
  %v278 = vpack.c.b16 %v230, %v228
  %v279 = vpack.c.b16 %v233, %v231
  %v280 = vpack.c.b16 %v234, %v232
  %v281 = vpack.c.b16 %v237, %v235
  %v282 = vpack.c.b16 %v238, %v236
  %v283 = vpack.c.b16 %v241, %v239
  %v284 = vpack.c.b16 %v242, %v240
  %v285 = vpack.c.b16 %v245, %v243
  %v286 = vpack.c.b16 %v246, %v244
  %v287 = vpack.c.b16 %v249, %v247
  %v288 = vpack.c.b16 %v250, %v248
  %v289 = vpack.c.b16 %v253, %v251
  %v290 = vpack.c.b16 %v254, %v252
  %v291 = vpack.c.b16 %v257, %v255
  %v292 = vpack.c.b16 %v258, %v256
  %v293 = vpack.c.b16 %v261, %v259
  %v294 = vpack.c.b16 %v262, %v260
  %327 = vmatprep.subr.bf16.mxu0 %v264
  %328 = vmatpush1.bf16.msra.mxu0 %v263
  %329 = vmatprep.subr.bf16.mxu0 %v266
  %330 = vmatpush1.bf16.msra.mxu0 %v265
  %331 = vmatprep.subr.bf16.mxu0 %v268
  %332 = vmatpush1.bf16.msra.mxu0 %v267
  %333 = vmatprep.subr.bf16.mxu0 %v270
  %334 = vmatpush1.bf16.msra.mxu0 %v269
  %335 = vmatprep.subr.bf16.mxu0 %v272
  %336 = vmatpush1.bf16.msra.mxu0 %v271
  %337 = vmatprep.subr.bf16.mxu0 %v274
  %338 = vmatpush1.bf16.msra.mxu0 %v273
  %339 = vmatprep.subr.bf16.mxu0 %v276
  %340 = vmatpush1.bf16.msra.mxu0 %v275
  %341 = vmatprep.subr.bf16.mxu0 %v278
  %342 = vmatpush1.bf16.msra.mxu0 %v277
  %343 = vmatprep.subr.bf16.mxu0 %v280
  %344 = vmatpush1.bf16.msra.mxu0 %v279
  %345 = vmatprep.subr.bf16.mxu0 %v282
  %346 = vmatpush1.bf16.msra.mxu0 %v281
  %347 = vmatprep.subr.bf16.mxu0 %v284
  %348 = vmatpush1.bf16.msra.mxu0 %v283
  %349 = vmatprep.subr.bf16.mxu0 %v286
  %350 = vmatpush1.bf16.msra.mxu0 %v285
  %351 = vmatprep.subr.bf16.mxu0 %v288
  %352 = vmatpush1.bf16.msra.mxu0 %v287
  %353 = vmatprep.subr.bf16.mxu0 %v290
  %354 = vmatpush1.bf16.msra.mxu0 %v289
  %355 = vmatprep.subr.bf16.mxu0 %v292
  %356 = vmatpush1.bf16.msra.mxu0 %v291
  %357 = vmatprep.subr.bf16.mxu0 %v294
  %358 = vmatpush1.bf16.msra.mxu0 %v293
  %359 = vmatprep.mubr.bf16.mxu0 %v122
  %360 = vmatmul.mubr.bf16.gmra.mrb[0].mxu0 %v121
  %v361 = vpop.f32.mrb[0].mxu0
  %v362 = vadd.f32 %v160, %v361
  %v363 = vpop.f32.mrb[0].mxu0
  %v364 = vadd.f32 %v164, %v363
  %v365 = vpop.f32.mrb[0].mxu0
  %v366 = vadd.f32 %v160, %v365
  %v367 = vpop.f32.mrb[0].mxu0
  %v368 = vadd.f32 %v164, %v367
  %369 = vdwg.mxu0
  %v370 = vmax.f32 %v362, 0.0
  %v371 = vmax.f32 %v364, 0.0
  %v372 = vmax.f32 %v366, 0.0
  %v373 = vmax.f32 %v368, 0.0
  %v374 = vpack.c.bf16 %v372, %v370
  %v375 = vpack.c.bf16 %v373, %v371
  %v376 = vld [vmem:[%s5] sm:$0xf]
  %v377 = vld [vmem:[%s5 + $0x4] sm:$0xf]
  %v378 = vld [vmem:[%s5 + $0x8] sm:$0xf]
  %v379 = vld [vmem:[%s5 + $0xc] sm:$0xf]
  %v380 = vld [vmem:[%s5 + $0x10] sm:$0xf]
  %v381 = vld [vmem:[%s5 + $0x14] sm:$0xf]
  %v382 = vld [vmem:[%s5 + $0x18] sm:$0xf]
  %v383 = vld [vmem:[%s5 + $0x1c] sm:$0xf]
  %v384 = vld [vmem:[%s5 + $0x20] sm:$0xf]
  %v385 = vld [vmem:[%s5 + $0x24] sm:$0xf]
  %v386 = vld [vmem:[%s5 + $0x28] sm:$0xf]
  %v387 = vld [vmem:[%s5 + $0x2c] sm:$0xf]
  %v388 = vld [vmem:[%s5 + $0x30] sm:$0xf]
  %v389 = vld [vmem:[%s5 + $0x34] sm:$0xf]
  %v390 = vld [vmem:[%s5 + $0x38] sm:$0xf]
  %v391 = vld [vmem:[%s5 + $0x3c] sm:$0xf]
  %v392 = vld [vmem:[%s5 + $0x40] sm:$0xf]
  %v393 = vld [vmem:[%s5 + $0x44] sm:$0xf]
  %v394 = vld [vmem:[%s5 + $0x48] sm:$0xf]
  %v395 = vld [vmem:[%s5 + $0x4c] sm:$0xf]
  %v396 = vld [vmem:[%s5 + $0x50] sm:$0xf]
  %v397 = vld [vmem:[%s5 + $0x54] sm:$0xf]
  %v398 = vld [vmem:[%s5 + $0x58] sm:$0xf]
  %v399 = vld [vmem:[%s5 + $0x5c] sm:$0xf]
  %v400 = vld [vmem:[%s5 + $0x60] sm:$0xf]
  %v401 = vld [vmem:[%s5 + $0x64] sm:$0xf]
  %v402 = vld [vmem:[%s5 + $0x68] sm:$0xf]
  %v403 = vld [vmem:[%s5 + $0x6c] sm:$0xf]
  %v404 = vld [vmem:[%s5 + $0x70] sm:$0xf]
  %v405 = vld [vmem:[%s5 + $0x74] sm:$0xf]
  %v406 = vld [vmem:[%s5 + $0x78] sm:$0xf]
  %v407 = vld [vmem:[%s5 + $0x7c] sm:$0xf]
  %v408 = vld [vmem:[%s6] sm:$0x1]
  %v410 = vlaneseq
  %v411 = vshrl.u32 %v410, 7
  %v412 = vsub.s32 0, %v411
  %v413 = vrot.slane %v408, %v412
  %v447 = vunpack.c.l.b16 %v376
  %v448 = vunpack.c.l.b16 %v377
  %v449 = vunpack.c.l.b16 %v378
  %v450 = vunpack.c.l.b16 %v379
  %v451 = vunpack.c.l.b16 %v380
  %v452 = vunpack.c.l.b16 %v381
  %v453 = vunpack.c.l.b16 %v382
  %v454 = vunpack.c.l.b16 %v383
  %v455 = vunpack.c.l.b16 %v384
  %v456 = vunpack.c.l.b16 %v385
  %v457 = vunpack.c.l.b16 %v386
  %v458 = vunpack.c.l.b16 %v387
  %v459 = vunpack.c.l.b16 %v388
  %v460 = vunpack.c.l.b16 %v389
  %v461 = vunpack.c.l.b16 %v390
  %v462 = vunpack.c.l.b16 %v391
  %v463 = vunpack.c.l.b16 %v392
  %v464 = vunpack.c.l.b16 %v393
  %v465 = vunpack.c.l.b16 %v394
  %v466 = vunpack.c.l.b16 %v395
  %v467 = vunpack.c.l.b16 %v396
  %v468 = vunpack.c.l.b16 %v397
  %v469 = vunpack.c.l.b16 %v398
  %v470 = vunpack.c.l.b16 %v399
  %v471 = vunpack.c.l.b16 %v400
  %v472 = vunpack.c.l.b16 %v401
  %v473 = vunpack.c.l.b16 %v402
  %v474 = vunpack.c.l.b16 %v403
  %v475 = vunpack.c.l.b16 %v404
  %v476 = vunpack.c.l.b16 %v405
  %v477 = vunpack.c.l.b16 %v406
  %v478 = vunpack.c.l.b16 %v407
  %v479 = vpack.c.b16 %v448, %v447
  %v480 = vpack.c.b16 %v450, %v449
  %v481 = vpack.c.b16 %v452, %v451
  %v482 = vpack.c.b16 %v454, %v453
  %v483 = vpack.c.b16 %v456, %v455
  %v484 = vpack.c.b16 %v458, %v457
  %v485 = vpack.c.b16 %v460, %v459
  %v486 = vpack.c.b16 %v462, %v461
  %v487 = vpack.c.b16 %v464, %v463
  %v488 = vpack.c.b16 %v466, %v465
  %v489 = vpack.c.b16 %v468, %v467
  %v490 = vpack.c.b16 %v470, %v469
  %v491 = vpack.c.b16 %v472, %v471
  %v492 = vpack.c.b16 %v474, %v473
  %v493 = vpack.c.b16 %v476, %v475
  %v494 = vpack.c.b16 %v478, %v477
  %511 = vmatprep.subr.bf16.mxu0 0
  %512 = vmatpush1.bf16.msra.mxu0 %v479
  %513 = vmatprep.subr.bf16.mxu0 0
  %514 = vmatpush1.bf16.msra.mxu0 %v480
  %515 = vmatprep.subr.bf16.mxu0 0
  %516 = vmatpush1.bf16.msra.mxu0 %v481
  %517 = vmatprep.subr.bf16.mxu0 0
  %518 = vmatpush1.bf16.msra.mxu0 %v482
  %519 = vmatprep.subr.bf16.mxu0 0
  %520 = vmatpush1.bf16.msra.mxu0 %v483
  %521 = vmatprep.subr.bf16.mxu0 0
  %522 = vmatpush1.bf16.msra.mxu0 %v484
  %523 = vmatprep.subr.bf16.mxu0 0
  %524 = vmatpush1.bf16.msra.mxu0 %v485
  %525 = vmatprep.subr.bf16.mxu0 0
  %526 = vmatpush1.bf16.msra.mxu0 %v486
  %527 = vmatprep.subr.bf16.mxu0 0
  %528 = vmatpush1.bf16.msra.mxu0 %v487
  %529 = vmatprep.subr.bf16.mxu0 0
  %530 = vmatpush1.bf16.msra.mxu0 %v488
  %531 = vmatprep.subr.bf16.mxu0 0
  %532 = vmatpush1.bf16.msra.mxu0 %v489
  %533 = vmatprep.subr.bf16.mxu0 0
  %534 = vmatpush1.bf16.msra.mxu0 %v490
  %535 = vmatprep.subr.bf16.mxu0 0
  %536 = vmatpush1.bf16.msra.mxu0 %v491
  %537 = vmatprep.subr.bf16.mxu0 0
  %538 = vmatpush1.bf16.msra.mxu0 %v492
  %539 = vmatprep.subr.bf16.mxu0 0
  %540 = vmatpush1.bf16.msra.mxu0 %v493
  %541 = vmatprep.subr.bf16.mxu0 0
  %542 = vmatpush1.bf16.msra.mxu0 %v494
  %543 = vmatprep.mubr.bf16.mxu0 %v375
  %544 = vmatmul.mubr.bf16.gmra.mrb[0].mxu0 %v374
  %v545 = vpop.f32.mrb[0].mxu0
  %v546 = vadd.f32 %v413, %v545
  %v547 = vpop.f32.mrb[0].mxu0
  %v548 = vpop.f32.mrb[0].mxu0
  %v549 = vadd.f32 %v413, %v548
  %v550 = vpop.f32.mrb[0].mxu0
  %551 = vdwg.mxu0
  %v552 = vpack.c.bf16 %v549, %v546
  %v554 = vunpack.c.l.b16 %v552
  %v555 = vunpack.c.h.b16 %v552
  %v556 = vpack.c.b16 %v554, %v554
  %v557 = vpack.c.b16 %v555, %v555
  %560 = vst [vmem:[%s7] sm:$0xf] %v556
  %561 = vst [vmem:[%s7 + $0x4] sm:$0xf] %v557
  // Predicated region
  $region30: #{network_forward.1} parent=0 // pred_check
    _
  $region31: #{network_forward.1} parent=0 // pred_check_branch
    %563 = sbr.rel (0) target = $region33
  $region32: #{network_forward.1} parent=0 // pred_region
    _
  $region33: #{network_forward.1} parent=0 // pred_fallthru
    _
  // Predicated region
  $region34: #{network_forward.1} parent=0 // pred_check
    _
  $region35: #{network_forward.1} parent=0 // pred_check_branch
    %565 = sbr.rel (0) target = $region37
  $region36: #{network_forward.1} parent=0 // pred_region
    _
  $region37: #{network_forward.1} parent=0 // pred_fallthru
    _

</llo_original>
